<compile_context>
chip_gen: v7x
topology: tpu7x:2x2x1
jax: 0.10.0
libtpu: 0.0.40
codegen_flags: <defaults>
</compile_context>

<pallas_src>
import jax
import jax.numpy as jnp
from jax.experimental import pallas as pl
from jax.experimental.pallas import tpu as pltpu

USE_BF16_MATMUL = True                                   # bf16 MXU inputs, f32 accumulation
MATMUL_WEIGHT_DTYPE = jnp.bfloat16 if USE_BF16_MATMUL else jnp.float32
SCAN_CHUNK = 256                                         # timesteps per Hillis-Steele chunk


def _vmem_budget_bytes():
    """Generation-aware scoped-VMEM budget (leave headroom below physical VMEM)."""
    try:
        cap = int(pltpu.get_tpu_info().vmem_capacity_bytes)
    except Exception:
        cap = 64 * 1024 * 1024                           # conservative fallback (v7x-sized)
    return max(16 * 1024 * 1024, min(int(cap * 3 // 4), 100 * 1024 * 1024))


def _pick_batch_tile(B, T, D, H, w_itemsize, budget):
    """Largest batch tile (multiple of 8 dividing B, or B) whose live set fits the
    VMEM budget; prefer >=2 batch programs so v7x megacore has work on both cores."""
    per_row = 4 * T * (2 * D + 8 * H)                    # x/out (dbl-buffered) + gates/a/b/temps, f32
    w_bytes = 2 * (D * 2 * H) * w_itemsize + 16 * H      # dbl-buffered gate weight + small params
    avail = max(budget - w_bytes, 0)
    candidates = [c for c in range(8, B + 1, 8) if B % c == 0] or [B]
    fitting = [c for c in candidates if c * per_row <= avail]
    if not fitting:
        return min(candidates)
    pref = [c for c in fitting if B // c >= 2]
    return max(pref) if pref else max(fitting)


# ----------------------------- Pallas kernels ------------------------------ #

def stacked_mingru_kernel(x_ref, wzh_ref, bzh_ref, gamma_ref, beta_ref, h0_ref,
                          act_ref, hN_ref):
    """Grid = (batch_tiles, num_layers).  act_ref is the VMEM-resident activation
    accumulator shared across the layer axis (same block index, 'arbitrary' axis);
    hN_ref receives each layer's final (pre-LayerNorm) hidden state."""
    l = pl.program_id(1)

    # Layer 0: seed the resident activation with the embedding block.
    # TODO(synk): could avoid this VMEM->VMEM copy with input_output_aliases or a
    # single-buffered embedding spec; kept explicit for robustness.
    @pl.when(l == 0)
    def _():
        act_ref[...] = x_ref[...]

    x = act_ref[...]                                     # (bb, T, D) layer input, f32
    bb, T, D = x.shape
    H2 = wzh_ref.shape[-1]
    H = H2 // 2

    # Fused gate matmul: one MXU pass computes both z and h~ (bf16 in, f32 acc).
    lhs = x.reshape(bb * T, D).astype(wzh_ref.dtype)
    gates = (jnp.dot(lhs, wzh_ref[...], preferred_element_type=jnp.float32)
             + bzh_ref[...])                             # (bb*T, 2H) f32
    z = jax.nn.sigmoid(gates[:, :H])                     # update gate
    a_full = (1.0 - z).reshape(bb, T, H)                 # h_t = a_t*h_{t-1} + b_t
    b_full = (z * gates[:, H:]).reshape(bb, T, H)

    # Chunked Hillis-Steele scan: log2(CH) roll+select+FMA passes per chunk,
    # serial (a,b) carry across chunks keeps the live set bounded for long T.
    CH = T if (T <= SCAN_CHUNK or T % SCAN_CHUNK != 0) else SCAN_CHUNK
    t_local = jax.lax.broadcasted_iota(jnp.int32, (bb, CH, H), 1).reshape(bb * CH, H)

    gamma = gamma_ref[...]                               # (1, H)
    beta = beta_ref[...]                                 # (1, H)
    carry = h0_ref[...]                                  # (bb, H)

    for c0 in range(0, T, CH):
        a2 = a_full[:, c0:c0 + CH, :].reshape(bb * CH, H)
        b2 = b_full[:, c0:c0 + CH, :].reshape(bb * CH, H)
        d = 1
        while d < CH:
            keep = t_local >= d                          # identity padding below d
            sa = jnp.where(keep, pltpu.roll(a2, shift=d, axis=0), 1.0)
            sb = jnp.where(keep, pltpu.roll(b2, shift=d, axis=0), 0.0)
            b2 = a2 * sb + b2                            # uses old a2 (order matters)
            a2 = a2 * sa
            d *= 2
        A = a2.reshape(bb, CH, H)                        # cumulative prod of (1-z)
        Bc = b2.reshape(bb, CH, H)                       # zero-initial-state scan
        h_c = A * carry[:, None, :] + Bc                 # fold the incoming carry
        carry = h_c[:, CH - 1, :]

        # Fused LayerNorm (over features) + residual, stored straight to act_ref.
        mean = jnp.mean(h_c, axis=-1, keepdims=True)
        var = jnp.mean((h_c - mean) ** 2, axis=-1, keepdims=True)
        normed = (h_c - mean) * jax.lax.rsqrt(var + 1e-5)
        act_ref[:, c0:c0 + CH, :] = normed * gamma + beta + x[:, c0:c0 + CH, :]

    hN_ref[...] = carry                                  # final pre-LN hidden


def fc_kernel(x_ref, w_ref, b_ref, o_ref):
    """Tiled final projection to vocab logits: (tm, H) @ (H, tn) + (1, tn)."""
    o_ref[...] = (jnp.dot(x_ref[...].astype(w_ref.dtype), w_ref[...],
                          preferred_element_type=jnp.float32) + b_ref[...])


# ------------------------------ Wrappers ----------------------------------- #

def stacked_mingru(x, w_zh, b_zh, gamma, beta, h0):
    """x: (B, T, D); w_zh: (L, D, 2H); b_zh: (L, 1, 2H); gamma/beta: (L, 1, H);
    h0: (L, B, H).  Returns (out (B, T, H), hidden (L, B, H))."""
    B, T, D = x.shape
    L, _, H2 = w_zh.shape
    H = H2 // 2
    budget = _vmem_budget_bytes()
    bb = _pick_batch_tile(B, T, D, H, jnp.dtype(w_zh.dtype).itemsize, budget)
    grid = (B // bb, L)

    out_shapes = (
        jax.ShapeDtypeStruct((B, T, H), jnp.float32),
        jax.ShapeDtypeStruct((L, B, H), jnp.float32),
    )
    return pl.pallas_call(
        stacked_mingru_kernel,
        out_shape=out_shapes,
        grid=grid,
        in_specs=[
            pl.BlockSpec((bb, T, D), lambda bi, l: (bi, 0, 0)),     # embedding (read @ l==0)
            pl.BlockSpec((None, D, H2), lambda bi, l: (l, 0, 0)),   # fused gate weight (bf16)
            pl.BlockSpec((None, 1, H2), lambda bi, l: (l, 0, 0)),   # fused gate bias (f32)
            pl.BlockSpec((None, 1, H), lambda bi, l: (l, 0, 0)),    # LN gamma
            pl.BlockSpec((None, 1, H), lambda bi, l: (l, 0, 0)),    # LN beta
            pl.BlockSpec((None, bb, H), lambda bi, l: (l, bi, 0)),  # initial hidden
        ],
        out_specs=(
            pl.BlockSpec((bb, T, H), lambda bi, l: (bi, 0, 0)),     # VMEM-resident activation
            pl.BlockSpec((None, bb, H), lambda bi, l: (l, bi, 0)),  # per-layer final hidden
        ),
        compiler_params=pltpu.CompilerParams(
            dimension_semantics=("parallel", "arbitrary"),
            vmem_limit_bytes=budget),
    )(x, w_zh, b_zh, gamma, beta, h0)


def fc_layer(x2d, w, b, *, tm=512, tn=512):
    """(N, H) @ (H, V) + (1, V), tiled over rows and vocab.  Larger row tiles
    reduce re-streaming of the (H, V) weight (HBM-bound for realistic vocabs)."""
    N, H = x2d.shape
    V = w.shape[1]
    if N % tm != 0:
        tm = next((c for c in (1024, 512, 256, 128, 64, 32, 16, 8) if N % c == 0), N)
    if V % tn != 0:
        tn = next((c for c in (512, 256, 128) if V % c == 0), V)
    grid = (N // tm, V // tn)
    return pl.pallas_call(
        fc_kernel,
        out_shape=jax.ShapeDtypeStruct((N, V), jnp.float32),
        grid=grid,
        in_specs=[
            pl.BlockSpec((tm, H), lambda i, j: (i, 0)),
            pl.BlockSpec((H, tn), lambda i, j: (0, j)),
            pl.BlockSpec((1, tn), lambda i, j: (0, j)),
        ],
        out_specs=pl.BlockSpec((tm, tn), lambda i, j: (i, j)),
        compiler_params=pltpu.CompilerParams(
            dimension_semantics=("parallel", "parallel"),
            vmem_limit_bytes=_vmem_budget_bytes()),
    )(x2d, w, b)


def gru_language_model(token_ids, params, hidden=None):
    """Forward pass.  Returns (logits (B, T, V), hidden (L, B, H))."""
    embed_table = params["embed"]                        # (V, E)
    B, T = token_ids.shape
    x = jnp.take(embed_table, token_ids, axis=0)         # (B, T, E) — glue gather (XLA)

    L, _, H2 = params["w_zh"].shape
    H = H2 // 2
    if hidden is None:
        hidden = jnp.zeros((L, B, H), jnp.float32)

    out, new_hidden = stacked_mingru(
        x, params["w_zh"], params["b_zh"], params["gamma"], params["beta"], hidden)

    V = params["fc_w"].shape[1]
    logits = fc_layer(out.reshape(B * T, H), params["fc_w"], params["fc_b"])
    return logits.reshape(B, T, V), new_hidden


# ------------------------- Deterministic init ------------------------------ #

def init_params(key, vocab_size, embed_dim, hidden_dim, num_layers):
    assert embed_dim == hidden_dim, "residual connection requires embed_dim == hidden_dim"
    k_emb, k_fc, k_w, k_b = jax.random.split(key, 4)
    wkeys = jax.random.split(k_w, num_layers)
    bkeys = jax.random.split(k_b, num_layers)

    def layer_weight(k):
        kz, kh = jax.random.split(k)
        wz = jax.random.normal(kz, (hidden_dim, hidden_dim), jnp.float32) / jnp.sqrt(hidden_dim)
        wh = jax.random.normal(kh, (hidden_dim, hidden_dim), jnp.float32) / jnp.sqrt(hidden_dim)
        return jnp.concatenate([wz, wh], axis=1)         # fused (H, 2H)

    w_zh = jnp.stack([layer_weight(wkeys[l]) for l in range(num_layers)], axis=0)
    b_zh = jnp.stack(
        [jax.random.normal(bkeys[l], (1, 2 * hidden_dim), jnp.float32) * 0.01
         for l in range(num_layers)], axis=0)
    params = {
        "embed": jax.random.normal(k_emb, (vocab_size, embed_dim), jnp.float32),
        "w_zh": w_zh.astype(MATMUL_WEIGHT_DTYPE),               # (L, H, 2H), bf16 in HBM
        "b_zh": b_zh,                                            # (L, 1, 2H), f32
        "gamma": jnp.ones((num_layers, 1, hidden_dim), jnp.float32),
        "beta": jnp.zeros((num_layers, 1, hidden_dim), jnp.float32),
        "fc_w": (jax.random.normal(k_fc, (hidden_dim, vocab_size), jnp.float32)
                 / jnp.sqrt(hidden_dim)).astype(MATMUL_WEIGHT_DTYPE),
        "fc_b": jnp.zeros((1, vocab_size), jnp.float32),
    }
    return params


# --------------------------------- Main ------------------------------------ #

if __name__ == "__main__":
    # Lane-dense config: feature / vocab dims are multiples of 128 so every vreg
    # and every store is fully populated.
    vocab_size, embed_dim, hidden_dim, num_layers = 256, 128, 128, 2
    batch, seq = 2, 8

    key = jax.random.PRNGKey(0)
    k_tok, k_par = jax.random.split(key)
    token_ids = jax.random.randint(k_tok, (batch, seq), 0, vocab_size, jnp.int32)
    params = init_params(k_par, vocab_size, embed_dim, hidden_dim, num_layers)

    logits, hidden = jax.jit(gru_language_model)(token_ids, params)
    jax.block_until_ready(logits)
    jax.block_until_ready(hidden)

    assert logits.shape == (batch, seq, vocab_size)
    assert hidden.shape == (num_layers, batch, hidden_dim)
    print("KERNEL_OK")
</pallas_src>

<mosaic_0001>
module attributes {stable_mosaic.version = 11 : i64} {
  func.func @fc_kernel(%arg0: i32, %arg1: i32, %arg2: memref<16x128xf32, #tpu.memory_space<vmem>>, %arg3: memref<128x256xbf16, #tpu.memory_space<vmem>>, %arg4: memref<1x256xf32, #tpu.memory_space<vmem>>, %arg5: memref<16x256xf32, #tpu.memory_space<vmem>>) attributes {dimension_semantics = [#tpu.dimension_semantics<parallel>, #tpu.dimension_semantics<parallel>], iteration_bounds = array<i64: 1, 1>, scalar_prefetch = 0 : i64, scratch_operands = 0 : i64, tpu.core_type = #tpu.core_type<tc>, window_params = [{transform_indices = @transform_0, window_bounds = array<i64: 16, 128>}, {transform_indices = @transform_1, window_bounds = array<i64: 128, 256>}, {transform_indices = @transform_2, window_bounds = array<i64: 1, 256>}, {transform_indices = @transform_3, window_bounds = array<i64: 16, 256>}]} {
    %c0 = arith.constant 0 : index
    %c0_0 = arith.constant 0 : index
    %0 = vector.load %arg2[%c0, %c0_0] : memref<16x128xf32, #tpu.memory_space<vmem>>, vector<16x128xf32>
    %1 = arith.truncf %0 : vector<16x128xf32> to vector<16x128xbf16>
    %c0_1 = arith.constant 0 : index
    %c0_2 = arith.constant 0 : index
    %2 = vector.load %arg3[%c0_1, %c0_2] : memref<128x256xbf16, #tpu.memory_space<vmem>>, vector<128x256xbf16>
    %cst = arith.constant dense<0.000000e+00> : vector<16x256xf32>
    %3 = tpu.matmul %1, %2, %cst {dimension_numbers = #tpu.dot_dimension_numbers<[1], [0], [0], [1], [0, 0, 1, 1], [], []>} : vector<16x128xbf16>, vector<128x256xbf16>, vector<16x256xf32> -> vector<16x256xf32>
    %c0_3 = arith.constant 0 : index
    %c0_4 = arith.constant 0 : index
    %4 = vector.load %arg4[%c0_3, %c0_4] : memref<1x256xf32, #tpu.memory_space<vmem>>, vector<1x256xf32>
    %5 = vector.broadcast %4 : vector<1x256xf32> to vector<16x256xf32>
    %6 = arith.addf %3, %5 : vector<16x256xf32>
    %c0_5 = arith.constant 0 : index
    %c0_6 = arith.constant 0 : index
    %7 = vector.load %arg5[%c0_5, %c0_6] : memref<16x256xf32, #tpu.memory_space<vmem>>, vector<16x256xf32>
    tpu.vector_store %arg5[%c0_5, %c0_6], %6 {strides = array<i32>} : memref<16x256xf32, #tpu.memory_space<vmem>>, vector<16x256xf32>,
    return
  }
  func.func @transform_0(%arg0: i32, %arg1: i32) -> (i32, i32) {
    %c0_i32 = arith.constant 0 : i32
    %c0_i32_0 = arith.constant 0 : i32
    return %arg0, %c0_i32 : i32, i32
  }
  func.func @transform_1(%arg0: i32, %arg1: i32) -> (i32, i32) {
    %c0_i32 = arith.constant 0 : i32
    %c0_i32_0 = arith.constant 0 : i32
    return %c0_i32, %arg1 : i32, i32
  }
  func.func @transform_2(%arg0: i32, %arg1: i32) -> (i32, i32) {
    %c0_i32 = arith.constant 0 : i32
    %c0_i32_0 = arith.constant 0 : i32
    return %c0_i32, %arg1 : i32, i32
  }
  func.func @transform_3(%arg0: i32, %arg1: i32) -> (i32, i32) {
    %c0_i32 = arith.constant 0 : i32
    return %arg0, %arg1 : i32, i32
  }
}

module attributes {stable_mosaic.version = 11 : i64} {
  func.func @stacked_mingru_kernel(%arg0: i32, %arg1: i32, %arg2: memref<2x8x128xf32, #tpu.memory_space<vmem>>, %arg3: memref<1x128x256xbf16, #tpu.memory_space<vmem>>, %arg4: memref<1x1x256xf32, #tpu.memory_space<vmem>>, %arg5: memref<1x1x128xf32, #tpu.memory_space<vmem>>, %arg6: memref<1x1x128xf32, #tpu.memory_space<vmem>>, %arg7: memref<1x2x128xf32, #tpu.memory_space<vmem>>, %arg8: memref<2x8x128xf32, #tpu.memory_space<vmem>>, %arg9: memref<1x2x128xf32, #tpu.memory_space<vmem>>) attributes {dimension_semantics = [#tpu.dimension_semantics<parallel>, #tpu.dimension_semantics<arbitrary>], iteration_bounds = array<i64: 1, 2>, scalar_prefetch = 0 : i64, scratch_operands = 0 : i64, tpu.core_type = #tpu.core_type<tc>, window_params = [{transform_indices = @transform_0, window_bounds = array<i64: 2, 8, 128>}, {transform_indices = @transform_1, window_bounds = array<i64: 1, 128, 256>}, {transform_indices = @transform_2, window_bounds = array<i64: 1, 1, 256>}, {transform_indices = @transform_3, window_bounds = array<i64: 1, 1, 128>}, {transform_indices = @transform_4, window_bounds = array<i64: 1, 1, 128>}, {transform_indices = @transform_5, window_bounds = array<i64: 1, 2, 128>}, {transform_indices = @transform_6, window_bounds = array<i64: 2, 8, 128>}, {transform_indices = @transform_7, window_bounds = array<i64: 1, 2, 128>}]} {
    %c0_i32 = arith.constant 0 : i32
    %0 = arith.cmpi eq, %arg1, %c0_i32 : i32
    %1 = arith.extui %0 : i1 to i32
    %c0_i32_0 = arith.constant 0 : i32
    %2 = arith.cmpi ne, %1, %c0_i32_0 : i32
    scf.if %2 {
      %c0_43 = arith.constant 0 : index
      %c0_44 = arith.constant 0 : index
      %c0_45 = arith.constant 0 : index
      %105 = vector.load %arg2[%c0_43, %c0_44, %c0_45] : memref<2x8x128xf32, #tpu.memory_space<vmem>>, vector<2x8x128xf32>
      %c0_46 = arith.constant 0 : index
      %c0_47 = arith.constant 0 : index
      %c0_48 = arith.constant 0 : index
      %106 = vector.load %arg8[%c0_46, %c0_47, %c0_48] : memref<2x8x128xf32, #tpu.memory_space<vmem>>, vector<2x8x128xf32>
      tpu.vector_store %arg8[%c0_46, %c0_47, %c0_48], %105 {strides = array<i32>} : memref<2x8x128xf32, #tpu.memory_space<vmem>>, vector<2x8x128xf32>,
    } else {
    }
    %c0 = arith.constant 0 : index
    %c0_1 = arith.constant 0 : index
    %c0_2 = arith.constant 0 : index
    %3 = vector.load %arg8[%c0, %c0_1, %c0_2] : memref<2x8x128xf32, #tpu.memory_space<vmem>>, vector<2x8x128xf32>
    %4 = vector.shape_cast %3 : vector<2x8x128xf32> to vector<16x128xf32>
    %5 = arith.truncf %4 : vector<16x128xf32> to vector<16x128xbf16>
    %c0_3 = arith.constant 0 : index
    %c0_4 = arith.constant 0 : index
    %c0_5 = arith.constant 0 : index
    %6 = vector.load %arg3[%c0_3, %c0_4, %c0_5] : memref<1x128x256xbf16, #tpu.memory_space<vmem>>, vector<1x128x256xbf16>
    %7 = vector.shape_cast %6 : vector<1x128x256xbf16> to vector<128x256xbf16>
    %cst = arith.constant dense<0.000000e+00> : vector<16x256xf32>
    %8 = tpu.matmul %5, %7, %cst {dimension_numbers = #tpu.dot_dimension_numbers<[1], [0], [0], [1], [0, 0, 1, 1], [], []>} : vector<16x128xbf16>, vector<128x256xbf16>, vector<16x256xf32> -> vector<16x256xf32>
    %c0_6 = arith.constant 0 : index
    %c0_7 = arith.constant 0 : index
    %c0_8 = arith.constant 0 : index
    %9 = vector.load %arg4[%c0_6, %c0_7, %c0_8] : memref<1x1x256xf32, #tpu.memory_space<vmem>>, vector<1x1x256xf32>
    %10 = vector.shape_cast %9 : vector<1x1x256xf32> to vector<1x256xf32>
    %11 = vector.broadcast %10 : vector<1x256xf32> to vector<16x256xf32>
    %12 = arith.addf %8, %11 : vector<16x256xf32>
    %13 = vector.extract_strided_slice %12 {offsets = [0, 0], sizes = [16, 128], strides = [1, 1]} : vector<16x256xf32> to vector<16x128xf32>
    %14 = arith.negf %13 : vector<16x128xf32>
    %15 = math.exp %14 : vector<16x128xf32>
    %cst_9 = arith.constant 1.000000e+00 : f32
    %16 = vector.broadcast %cst_9 : f32 to vector<16x128xf32>
    %17 = arith.addf %16, %15 : vector<16x128xf32>
    %18 = arith.divf %16, %17 : vector<16x128xf32>
    %cst_10 = arith.constant 1.000000e+00 : f32
    %19 = vector.broadcast %cst_10 : f32 to vector<16x128xf32>
    %20 = arith.subf %19, %18 : vector<16x128xf32>
    %21 = vector.shape_cast %20 : vector<16x128xf32> to vector<2x8x128xf32>
    %22 = vector.extract_strided_slice %12 {offsets = [0, 128], sizes = [16, 128], strides = [1, 1]} : vector<16x256xf32> to vector<16x128xf32>
    %23 = arith.mulf %18, %22 : vector<16x128xf32>
    %24 = vector.shape_cast %23 : vector<16x128xf32> to vector<2x8x128xf32>
    %25 = tpu.iota {dimensions = array<i32: 1>} : vector<2x8x128xi32>
    %26 = vector.shape_cast %25 : vector<2x8x128xi32> to vector<16x128xi32>
    %c0_11 = arith.constant 0 : index
    %c0_12 = arith.constant 0 : index
    %c0_13 = arith.constant 0 : index
    %27 = vector.load %arg5[%c0_11, %c0_12, %c0_13] : memref<1x1x128xf32, #tpu.memory_space<vmem>>, vector<1x1x128xf32>
    %28 = vector.shape_cast %27 : vector<1x1x128xf32> to vector<1x128xf32>
    %c0_14 = arith.constant 0 : index
    %c0_15 = arith.constant 0 : index
    %c0_16 = arith.constant 0 : index
    %29 = vector.load %arg6[%c0_14, %c0_15, %c0_16] : memref<1x1x128xf32, #tpu.memory_space<vmem>>, vector<1x1x128xf32>
    %30 = vector.shape_cast %29 : vector<1x1x128xf32> to vector<1x128xf32>
    %c0_17 = arith.constant 0 : index
    %c0_18 = arith.constant 0 : index
    %c0_19 = arith.constant 0 : index
    %31 = vector.load %arg7[%c0_17, %c0_18, %c0_19] : memref<1x2x128xf32, #tpu.memory_space<vmem>>, vector<1x2x128xf32>
    %32 = vector.shape_cast %31 : vector<1x2x128xf32> to vector<2x128xf32>
    %33 = vector.shape_cast %21 : vector<2x8x128xf32> to vector<16x128xf32>
    %34 = vector.shape_cast %24 : vector<2x8x128xf32> to vector<16x128xf32>
    %c1_i32 = arith.constant 1 : i32
    %35 = vector.broadcast %c1_i32 : i32 to vector<16x128xi32>
    %36 = arith.cmpi sge, %26, %35 : vector<16x128xi32>
    %c1_i32_20 = arith.constant 1 : i32
    %37 = tpu.dynamic_rotate %33 by %c1_i32_20 dim 0 : vector<16x128xf32>, i32 -> vector<16x128xf32>
    %cst_21 = arith.constant 1.000000e+00 : f32
    %38 = vector.broadcast %cst_21 : f32 to vector<16x128xf32>
    %39 = arith.select %36, %37, %38 : vector<16x128xi1>, vector<16x128xf32>
    %c1_i32_22 = arith.constant 1 : i32
    %40 = tpu.dynamic_rotate %34 by %c1_i32_22 dim 0 : vector<16x128xf32>, i32 -> vector<16x128xf32>
    %cst_23 = arith.constant 0.000000e+00 : f32
    %41 = vector.broadcast %cst_23 : f32 to vector<16x128xf32>
    %42 = arith.select %36, %40, %41 : vector<16x128xi1>, vector<16x128xf32>
    %43 = arith.mulf %33, %42 : vector<16x128xf32>
    %44 = arith.addf %43, %34 : vector<16x128xf32>
    %45 = arith.mulf %33, %39 : vector<16x128xf32>
    %c2_i32 = arith.constant 2 : i32
    %46 = vector.broadcast %c2_i32 : i32 to vector<16x128xi32>
    %47 = arith.cmpi sge, %26, %46 : vector<16x128xi32>
    %c2_i32_24 = arith.constant 2 : i32
    %48 = tpu.dynamic_rotate %45 by %c2_i32_24 dim 0 : vector<16x128xf32>, i32 -> vector<16x128xf32>
    %cst_25 = arith.constant 1.000000e+00 : f32
    %49 = vector.broadcast %cst_25 : f32 to vector<16x128xf32>
    %50 = arith.select %47, %48, %49 : vector<16x128xi1>, vector<16x128xf32>
    %c2_i32_26 = arith.constant 2 : i32
    %51 = tpu.dynamic_rotate %44 by %c2_i32_26 dim 0 : vector<16x128xf32>, i32 -> vector<16x128xf32>
    %cst_27 = arith.constant 0.000000e+00 : f32
    %52 = vector.broadcast %cst_27 : f32 to vector<16x128xf32>
    %53 = arith.select %47, %51, %52 : vector<16x128xi1>, vector<16x128xf32>
    %54 = arith.mulf %45, %53 : vector<16x128xf32>
    %55 = arith.addf %54, %44 : vector<16x128xf32>
    %56 = arith.mulf %45, %50 : vector<16x128xf32>
    %c4_i32 = arith.constant 4 : i32
    %57 = vector.broadcast %c4_i32 : i32 to vector<16x128xi32>
    %58 = arith.cmpi sge, %26, %57 : vector<16x128xi32>
    %c4_i32_28 = arith.constant 4 : i32
    %59 = tpu.dynamic_rotate %56 by %c4_i32_28 dim 0 : vector<16x128xf32>, i32 -> vector<16x128xf32>
    %cst_29 = arith.constant 1.000000e+00 : f32
    %60 = vector.broadcast %cst_29 : f32 to vector<16x128xf32>
    %61 = arith.select %58, %59, %60 : vector<16x128xi1>, vector<16x128xf32>
    %c4_i32_30 = arith.constant 4 : i32
    %62 = tpu.dynamic_rotate %55 by %c4_i32_30 dim 0 : vector<16x128xf32>, i32 -> vector<16x128xf32>
    %cst_31 = arith.constant 0.000000e+00 : f32
    %63 = vector.broadcast %cst_31 : f32 to vector<16x128xf32>
    %64 = arith.select %58, %62, %63 : vector<16x128xi1>, vector<16x128xf32>
    %65 = arith.mulf %56, %64 : vector<16x128xf32>
    %66 = arith.addf %65, %55 : vector<16x128xf32>
    %67 = arith.mulf %56, %61 : vector<16x128xf32>
    %68 = vector.shape_cast %67 : vector<16x128xf32> to vector<2x8x128xf32>
    %69 = vector.shape_cast %66 : vector<16x128xf32> to vector<2x8x128xf32>
    %70 = vector.shape_cast %32 : vector<2x128xf32> to vector<2x1x128xf32>
    %71 = vector.broadcast %70 : vector<2x1x128xf32> to vector<2x8x128xf32>
    %72 = arith.mulf %68, %71 : vector<2x8x128xf32>
    %73 = arith.addf %72, %69 : vector<2x8x128xf32>
    %74 = vector.extract_strided_slice %73 {offsets = [0, 7, 0], sizes = [2, 1, 128], strides = [1, 1, 1]} : vector<2x8x128xf32> to vector<2x1x128xf32>
    %75 = vector.shape_cast %74 : vector<2x1x128xf32> to vector<2x128xf32>
    %cst_32 = arith.constant dense<0.000000e+00> : vector<2x8xf32>
    %76 = vector.multi_reduction <add>, %73, %cst_32 [2] : vector<2x8x128xf32> to vector<2x8xf32>
    %77 = vector.shape_cast %76 : vector<2x8xf32> to vector<2x8x1xf32>
    %cst_33 = arith.constant 1.280000e+02 : f32
    %78 = vector.broadcast %cst_33 : f32 to vector<2x8x1xf32>
    %79 = arith.divf %77, %78 : vector<2x8x1xf32>
    %80 = vector.broadcast %79 : vector<2x8x1xf32> to vector<2x8x128xf32>
    %81 = arith.subf %73, %80 : vector<2x8x128xf32>
    %82 = arith.mulf %81, %81 : vector<2x8x128xf32>
    %cst_34 = arith.constant dense<0.000000e+00> : vector<2x8xf32>
    %83 = vector.multi_reduction <add>, %82, %cst_34 [2] : vector<2x8x128xf32> to vector<2x8xf32>
    %84 = vector.shape_cast %83 : vector<2x8xf32> to vector<2x8x1xf32>
    %cst_35 = arith.constant 1.280000e+02 : f32
    %85 = vector.broadcast %cst_35 : f32 to vector<2x8x1xf32>
    %86 = arith.divf %84, %85 : vector<2x8x1xf32>
    %87 = vector.broadcast %79 : vector<2x8x1xf32> to vector<2x8x128xf32>
    %88 = arith.subf %73, %87 : vector<2x8x128xf32>
    %cst_36 = arith.constant 9.99999974E-6 : f32
    %89 = vector.broadcast %cst_36 : f32 to vector<2x8x1xf32>
    %90 = arith.addf %86, %89 : vector<2x8x1xf32>
    %91 = math.rsqrt %90 : vector<2x8x1xf32>
    %92 = vector.broadcast %91 : vector<2x8x1xf32> to vector<2x8x128xf32>
    %93 = arith.mulf %88, %92 : vector<2x8x128xf32>
    %94 = vector.shape_cast %28 : vector<1x128xf32> to vector<1x1x128xf32>
    %95 = vector.broadcast %94 : vector<1x1x128xf32> to vector<2x8x128xf32>
    %96 = arith.mulf %93, %95 : vector<2x8x128xf32>
    %97 = vector.shape_cast %30 : vector<1x128xf32> to vector<1x1x128xf32>
    %98 = vector.broadcast %97 : vector<1x1x128xf32> to vector<2x8x128xf32>
    %99 = arith.addf %96, %98 : vector<2x8x128xf32>
    %100 = arith.addf %99, %3 : vector<2x8x128xf32>
    %c0_37 = arith.constant 0 : index
    %c0_38 = arith.constant 0 : index
    %c0_39 = arith.constant 0 : index
    %101 = vector.load %arg8[%c0_37, %c0_38, %c0_39] : memref<2x8x128xf32, #tpu.memory_space<vmem>>, vector<2x8x128xf32>
    tpu.vector_store %arg8[%c0_37, %c0_38, %c0_39], %100 {strides = array<i32>} : memref<2x8x128xf32, #tpu.memory_space<vmem>>, vector<2x8x128xf32>,
    %c0_40 = arith.constant 0 : index
    %c0_41 = arith.constant 0 : index
    %c0_42 = arith.constant 0 : index
    %102 = vector.load %arg9[%c0_40, %c0_41, %c0_42] : memref<1x2x128xf32, #tpu.memory_space<vmem>>, vector<1x2x128xf32>
    %103 = vector.shape_cast %102 : vector<1x2x128xf32> to vector<2x128xf32>
    %104 = vector.shape_cast %75 : vector<2x128xf32> to vector<1x2x128xf32>
    tpu.vector_store %arg9[%c0_40, %c0_41, %c0_42], %104 {strides = array<i32>} : memref<1x2x128xf32, #tpu.memory_space<vmem>>, vector<1x2x128xf32>,
    return
  }
  func.func @transform_0(%arg0: i32, %arg1: i32) -> (i32, i32, i32) {
    %c0_i32 = arith.constant 0 : i32
    %c0_i32_0 = arith.constant 0 : i32
    %c0_i32_1 = arith.constant 0 : i32
    return %arg0, %c0_i32, %c0_i32_0 : i32, i32, i32
  }
  func.func @transform_1(%arg0: i32, %arg1: i32) -> (i32, i32, i32) {
    %c0_i32 = arith.constant 0 : i32
    %c0_i32_0 = arith.constant 0 : i32
    %c0_i32_1 = arith.constant 0 : i32
    return %arg1, %c0_i32, %c0_i32_0 : i32, i32, i32
  }
  func.func @transform_2(%arg0: i32, %arg1: i32) -> (i32, i32, i32) {
    %c0_i32 = arith.constant 0 : i32
    %c0_i32_0 = arith.constant 0 : i32
    %c0_i32_1 = arith.constant 0 : i32
    return %arg1, %c0_i32, %c0_i32_0 : i32, i32, i32
  }
  func.func @transform_3(%arg0: i32, %arg1: i32) -> (i32, i32, i32) {
    %c0_i32 = arith.constant 0 : i32
    %c0_i32_0 = arith.constant 0 : i32
    %c0_i32_1 = arith.constant 0 : i32
    return %arg1, %c0_i32, %c0_i32_0 : i32, i32, i32
  }
  func.func @transform_4(%arg0: i32, %arg1: i32) -> (i32, i32, i32) {
    %c0_i32 = arith.constant 0 : i32
    %c0_i32_0 = arith.constant 0 : i32
    %c0_i32_1 = arith.constant 0 : i32
    return %arg1, %c0_i32, %c0_i32_0 : i32, i32, i32
  }
  func.func @transform_5(%arg0: i32, %arg1: i32) -> (i32, i32, i32) {
    %c0_i32 = arith.constant 0 : i32
    %c0_i32_0 = arith.constant 0 : i32
    return %arg1, %arg0, %c0_i32 : i32, i32, i32
  }
  func.func @transform_6(%arg0: i32, %arg1: i32) -> (i32, i32, i32) {
    %c0_i32 = arith.constant 0 : i32
    %c0_i32_0 = arith.constant 0 : i32
    %c0_i32_1 = arith.constant 0 : i32
    return %arg0, %c0_i32, %c0_i32_0 : i32, i32, i32
  }
  func.func @transform_7(%arg0: i32, %arg1: i32) -> (i32, i32, i32) {
    %c0_i32 = arith.constant 0 : i32
    %c0_i32_0 = arith.constant 0 : i32
    return %arg1, %arg0, %c0_i32 : i32, i32, i32
  }
}

</mosaic_0001>

<llo_original>
// kernel: gru_language_model.3
$region0: #{gru_language_model.3}
  #allocation0 [shape = 'u32[]', space=smem, size = 0x4, offset = 0x4, fixed_abs, tag = 'smem constant byte address 0x4 - core index']
  #allocation1 [shape = 'u32[144,128]{1,0:T(1,128)}', space=vmem, size = 0x12000, scoped, tag = 'internal scratch']
  %s0 = inlined_call_operand.vmem [shape: f32[16,128], index: 0, kind: input, shape index: {}]
  %s1 = inlined_call_operand.vmem [shape: bf16[128,256], index: 1, kind: input, shape index: {}]
  %s2 = inlined_call_operand.vmem [shape: f32[1,256], index: 2, kind: input, shape index: {}]
  %s3 = inlined_call_operand.hbm [shape: f32[16,256], index: 3, kind: output, shape index: {}]
  %s4 = sld [smem:[#allocation0]]
  $region22: #{gru_language_model.3} parent=0
    _
  %s6 = ssub.s32 1, %s4
  %s7 = scalar_select 0, %s6, %s4
  $region1: #{gru_language_model.3} parent=0
    #allocation2 [shape = 'u8[16384]{0}', space=vmem, size = 0x4000, scoped, tag = 'output window, operand 0, single buffered']
    #allocation3 [shape = 's32[1]{0}', space=sflag, size = 0x4, scoped, tag = 'scoped memory for gru_language_model.3']
    %8 = vsyncpa [#allocation3], 0
    // Predicated region
    $region2: #{gru_language_model.3} parent=1 // pred_check
      _
    $region3: #{gru_language_model.3} parent=1 // pred_check_branch
      %10 = sbr.rel (0) target = $region5
    $region4: #{gru_language_model.3} parent=1 // pred_region
      _
    $region5: #{gru_language_model.3} parent=1 // pred_fallthru
      _
    // Predicated region
    $region6: #{gru_language_model.3} parent=1 // pred_check
      _
    $region7: #{gru_language_model.3} parent=1 // pred_check_branch
      %12 = sbr.rel (0) target = $region9
    $region8: #{gru_language_model.3} parent=1 // pred_region
      _
    $region9: #{gru_language_model.3} parent=1 // pred_fallthru
      _
    // Predicated region
    $region10: #{gru_language_model.3} parent=1 // pred_check
      _
    $region11: #{gru_language_model.3} parent=1 // pred_check_branch
      %14 = sbr.rel (0) target = $region13
    $region12: #{gru_language_model.3} parent=1 // pred_region
      _
    $region13: #{gru_language_model.3} parent=1 // pred_fallthru
      _
    %v16 = vld [vmem:[%s0] sm:$0xff]
    %v17 = vld [vmem:[%s0 + $0x8] sm:$0xff]
    %v18 = vpack.c.bf16 %v17, %v16
    %v19 = vld [vmem:[%s1] sm:$0xff]
    %v20 = vld [vmem:[%s1 + $0x8] sm:$0xff]
    %v21 = vld [vmem:[%s1 + $0x10] sm:$0xff]
    %v22 = vld [vmem:[%s1 + $0x18] sm:$0xff]
    %v23 = vld [vmem:[%s1 + $0x20] sm:$0xff]
    %v24 = vld [vmem:[%s1 + $0x28] sm:$0xff]
    %v25 = vld [vmem:[%s1 + $0x30] sm:$0xff]
    %v26 = vld [vmem:[%s1 + $0x38] sm:$0xff]
    %v27 = vld [vmem:[%s1 + $0x40] sm:$0xff]
    %v28 = vld [vmem:[%s1 + $0x48] sm:$0xff]
    %v29 = vld [vmem:[%s1 + $0x50] sm:$0xff]
    %v30 = vld [vmem:[%s1 + $0x58] sm:$0xff]
    %v31 = vld [vmem:[%s1 + $0x60] sm:$0xff]
    %v32 = vld [vmem:[%s1 + $0x68] sm:$0xff]
    %v33 = vld [vmem:[%s1 + $0x70] sm:$0xff]
    %v34 = vld [vmem:[%s1 + $0x78] sm:$0xff]
    %v35 = vld [vmem:[%s2] sm:$0x3]
    %v37 = vlaneseq
    %v38 = vshrl.u32 %v37, 7
    %v39 = vsub.s32 0, %v38
    %v40 = vrot.slane %v35, %v39
    %v41 = vlaneseq
    %v42 = vshrl.u32 %v41, 7
    %v43 = vsub.s32 1, %v42
    %v44 = vrot.slane %v35, %v43
    %v63 = vunpack.c.l.b16 %v19
    %v64 = vunpack.c.h.b16 %v19
    %v65 = vunpack.c.l.b16 %v20
    %v66 = vunpack.c.h.b16 %v20
    %v67 = vunpack.c.l.b16 %v21
    %v68 = vunpack.c.h.b16 %v21
    %v69 = vunpack.c.l.b16 %v22
    %v70 = vunpack.c.h.b16 %v22
    %v71 = vunpack.c.l.b16 %v23
    %v72 = vunpack.c.h.b16 %v23
    %v73 = vunpack.c.l.b16 %v24
    %v74 = vunpack.c.h.b16 %v24
    %v75 = vunpack.c.l.b16 %v25
    %v76 = vunpack.c.h.b16 %v25
    %v77 = vunpack.c.l.b16 %v26
    %v78 = vunpack.c.h.b16 %v26
    %v79 = vunpack.c.l.b16 %v27
    %v80 = vunpack.c.h.b16 %v27
    %v81 = vunpack.c.l.b16 %v28
    %v82 = vunpack.c.h.b16 %v28
    %v83 = vunpack.c.l.b16 %v29
    %v84 = vunpack.c.h.b16 %v29
    %v85 = vunpack.c.l.b16 %v30
    %v86 = vunpack.c.h.b16 %v30
    %v87 = vunpack.c.l.b16 %v31
    %v88 = vunpack.c.h.b16 %v31
    %v89 = vunpack.c.l.b16 %v32
    %v90 = vunpack.c.h.b16 %v32
    %v91 = vunpack.c.l.b16 %v33
    %v92 = vunpack.c.h.b16 %v33
    %v93 = vunpack.c.l.b16 %v34
    %v94 = vunpack.c.h.b16 %v34
    %v95 = vpack.c.b16 %v65, %v63
    %v96 = vpack.c.b16 %v66, %v64
    %v97 = vpack.c.b16 %v69, %v67
    %v98 = vpack.c.b16 %v70, %v68
    %v99 = vpack.c.b16 %v73, %v71
    %v100 = vpack.c.b16 %v74, %v72
    %v101 = vpack.c.b16 %v77, %v75
    %v102 = vpack.c.b16 %v78, %v76
    %v103 = vpack.c.b16 %v81, %v79
    %v104 = vpack.c.b16 %v82, %v80
    %v105 = vpack.c.b16 %v85, %v83
    %v106 = vpack.c.b16 %v86, %v84
    %v107 = vpack.c.b16 %v89, %v87
    %v108 = vpack.c.b16 %v90, %v88
    %v109 = vpack.c.b16 %v93, %v91
    %v110 = vpack.c.b16 %v94, %v92
    %127 = vmatprep.subr.bf16.mxu0 %v96
    %128 = vmatpush1.bf16.msra.mxu0 %v95
    %129 = vmatprep.subr.bf16.mxu0 %v98
    %130 = vmatpush1.bf16.msra.mxu0 %v97
    %131 = vmatprep.subr.bf16.mxu0 %v100
    %132 = vmatpush1.bf16.msra.mxu0 %v99
    %133 = vmatprep.subr.bf16.mxu0 %v102
    %134 = vmatpush1.bf16.msra.mxu0 %v101
    %135 = vmatprep.subr.bf16.mxu0 %v104
    %136 = vmatpush1.bf16.msra.mxu0 %v103
    %137 = vmatprep.subr.bf16.mxu0 %v106
    %138 = vmatpush1.bf16.msra.mxu0 %v105
    %139 = vmatprep.subr.bf16.mxu0 %v108
    %140 = vmatpush1.bf16.msra.mxu0 %v107
    %141 = vmatprep.subr.bf16.mxu0 %v110
    %142 = vmatpush1.bf16.msra.mxu0 %v109
    %143 = vmatprep.subr.bf16.mxu0 0
    %144 = vmatpush1.bf16.msra.mxu0 0
    %145 = vmatprep.subr.bf16.mxu0 0
    %146 = vmatpush1.bf16.msra.mxu0 0
    %147 = vmatprep.subr.bf16.mxu0 0
    %148 = vmatpush1.bf16.msra.mxu0 0
    %149 = vmatprep.subr.bf16.mxu0 0
    %150 = vmatpush1.bf16.msra.mxu0 0
    %151 = vmatprep.subr.bf16.mxu0 0
    %152 = vmatpush1.bf16.msra.mxu0 0
    %153 = vmatprep.subr.bf16.mxu0 0
    %154 = vmatpush1.bf16.msra.mxu0 0
    %155 = vmatprep.subr.bf16.mxu0 0
    %156 = vmatpush1.bf16.msra.mxu0 0
    %157 = vmatprep.subr.bf16.mxu0 0
    %158 = vmatpush1.bf16.msra.mxu0 0
    %159 = vmatprep.mubr.bf16.mxu0 0
    %160 = vmatmul.mubr.bf16.gmra.mrb[0].mxu0 %v18
    %v161 = vpop.f32.mrb[0].mxu0
    %v162 = vadd.f32 %v40, %v161
    %v163 = vpop.f32.mrb[0].mxu0
    %v164 = vadd.f32 %v44, %v163
    %v165 = vpop.f32.mrb[0].mxu0
    %v166 = vadd.f32 %v40, %v165
    %v167 = vpop.f32.mrb[0].mxu0
    %v168 = vadd.f32 %v44, %v167
    %169 = vdwg.mxu0
    %170 = vst [vmem:[#allocation2] sm:$0xff] %v162
    %171 = vst [vmem:[#allocation2 + $0x8] sm:$0xff] %v164
    %172 = vst [vmem:[#allocation2 + $0x10] sm:$0xff] %v166
    %173 = vst [vmem:[#allocation2 + $0x18] sm:$0xff] %v168
    // Predicated region
    $region14: #{gru_language_model.3} parent=1 // pred_check
      _
    $region15: #{gru_language_model.3} parent=1 // pred_check_branch
      %175 = sbr.rel (0) target = $region17
    $region16: #{gru_language_model.3} parent=1 // pred_region
      %s177 = ssub.s32 512, 512
      %178 = vsyncadd [#allocation3], %s177
      %s179 = sshll.u32 [#allocation2], 4
      %s180 = int_to_ptr.vmem [resolvable:$true] %s179
      %185 = dma.vmem_to_hbm [thread:$0]  %s180, 512, %s3, [#allocation3], 256, 256, 16
    $region17: #{gru_language_model.3} parent=1 // pred_fallthru
      _
    // Predicated region
    $region18: #{gru_language_model.3} parent=1 // pred_check
      _
    $region19: #{gru_language_model.3} parent=1 // pred_check_branch
      %187 = sbr.rel (0) target = $region21
    $region20: #{gru_language_model.3} parent=1 // pred_region
      %188 = dma.done [#allocation3], 512
    $region21: #{gru_language_model.3} parent=1 // pred_fallthru
      _
    %189 = vsyncpa [#allocation3], 1

// kernel: gru_language_model.2
$region0: #{gru_language_model.2}
  #allocation0 [shape = 'u32[]', space=smem, size = 0x4, offset = 0x4, fixed_abs, tag = 'smem constant byte address 0x4 - core index']
  #allocation1 [shape = 'u32[144,128]{1,0:T(1,128)}', space=vmem, size = 0x12000, scoped, tag = 'internal scratch']
  %s0 = inlined_call_operand.vmem [shape: f32[2,8,128], index: 0, kind: input, shape index: {}]
  %s1 = inlined_call_operand.hbm [shape: bf16[2,128,256], index: 1, kind: input, shape index: {}]
  %s2 = inlined_call_operand.vmem [shape: f32[2,1,256], index: 2, kind: input, shape index: {}]
  %s3 = inlined_call_operand.vmem [shape: f32[2,1,128], index: 3, kind: input, shape index: {}]
  %s4 = inlined_call_operand.vmem [shape: f32[2,1,128], index: 4, kind: input, shape index: {}]
  %s5 = inlined_call_operand.vmem [shape: f32[2,2,128], index: 5, kind: input, shape index: {}]
  %s6 = inlined_call_operand.vmem [shape: f32[2,8,128], index: 6, kind: output, shape index: {0}]
  %s7 = inlined_call_operand.hbm [shape: f32[2,2,128], index: 7, kind: output, shape index: {1}]
  %8 = xla_tuple %s6, %s7
  %s9 = sld [smem:[#allocation0]]
  $region73: #{gru_language_model.2} parent=0
    _
  %s11 = ssub.s32 1, %s9
  %s12 = scalar_select 0, %s11, %s9
  $region1: #{gru_language_model.2} parent=0
    #allocation2 [shape = 'u8[131072]{0}', space=vmem, size = 0x20000, scoped, tag = 'input window, operand 1']
    #allocation3 [shape = 's32[2]{0}', space=sflag, size = 0x8, scoped, tag = 'scoped memory for gru_language_model.2']
    #allocation4 [shape = 's32[2]{0}', space=sflag, size = 0x8, scoped, tag = 'scoped memory for gru_language_model.2']
    #allocation5 [shape = 'u8[2048]{0}', space=vmem, size = 0x800, scoped, tag = 'output window, operand 1']
    %13 = vsyncpa [#allocation3], 0
    %s14 = scalar_lea.sflag [#allocation3], 1
    %15 = vsyncpa %s14, 0
    %16 = vsyncpa [#allocation4], 0
    %s17 = scalar_lea.sflag [#allocation4], 1
    %18 = vsyncpa %s17, 0
    loop: start=0, step=1, limit=4
    $region2: #{gru_language_model.2} parent=1 // loop_pre_header
      _
    $region3: #{gru_language_model.2} parent=1 // loop_header
      %s20 = sphi 0, %s24
      %p21 = scmp.ge.s32.totalorder %s20, 4
      %s27 = sphi 0, %s39
      %s28 = sphi 0, %s35
      %s29 = sphi 0, %s27
      %s30 = sphi 0, %s28
      %s31 = sphi 0, %s29
      %s32 = sphi 0, %s30
      %s42 = sphi 0, %s44
      %s45 = sphi 0, %s42
      %s46 = sphi 0, %s45
      %s62 = sphi 0, %s46
      %s68 = sphi 0, %s70
      %s71 = sphi 0, %s68
      %s72 = sphi 0, %s71
      %s88 = sphi 0, %s72
      %s94 = sphi 0, %s96
      %s97 = sphi 0, %s94
      %s98 = sphi 0, %s97
      %s114 = sphi 0, %s98
      %s120 = sphi 0, %s122
      %s123 = sphi 0, %s120
      %s124 = sphi 0, %s123
      %s140 = sphi 0, %s124
      %s146 = sphi 0, %s148
      %s149 = sphi 0, %s146
      %s150 = sphi 0, %s149
      %s166 = sphi 0, %s150
      %s174 = sphi 0, %s176
      %s177 = sphi 0, %s174
      %s178 = sphi 0, %s177
      %s194 = sphi 0, %s178
      %s200 = sphi 0, %s202
      %s203 = sphi 0, %s200
      %s204 = sphi 0, %s203
      %s220 = sphi 0, %s204
      %s228 = sphi 0, %s230
      %s231 = sphi 0, %s228
      %s232 = sphi 0, %s231
      %s248 = sphi 0, %s232
    $region4: #{gru_language_model.2} parent=1 // loop_header_branch
      %23 = sbr.rel (%p21) target = $region8
    $region5: #{gru_language_model.2} parent=1 // loop_body
      %s25 = ssub.s32 %s20, 1
      %s26 = ssub.s32 %s20, 2
      %s33 = sadd.s32 1, %s28
      %p34 = scmp.ge.s32.totalorder %s33, 2
      %s35 = scalar_select %p34, 0, %s33
      %s36 = sadd.s32 1, %s27
      %s37 = scalar_select %p34, %s36, %s27
      %p38 = scmp.ge.s32.totalorder %s37, 1
      %s39 = scalar_select %p38, 0, %s37
      %s40 = ssub.s32 %s27, %s39
      %p41 = scmp.eq.s32.totalorder %s40, 0
      %s43 = sadd.s32 %s42, 1
      %s44 = scalar_select %p41, %s42, %s43
      %p47 = pneg %p41
      %p48 = scmp.eq.s32.totalorder %s20, 1
      %p49 = por %p47, %p48
      %p50 = scmp.ne.s32.totalorder %s42, %s45
      %p51 = scmp.eq.s32.totalorder %s20, 0
      %p52 = por %p50, %p51
      %p53 = scmp.ne.s32.totalorder %s42, %s45
      %p54 = scmp.eq.s32.totalorder %s25, 1
      %p55 = por %p53, %p54
      %p56 = scmp.ne.s32.totalorder %s45, %s46
      %p57 = scmp.eq.s32.totalorder %s25, 0
      %p58 = por %p56, %p57
      %p59 = scmp.ne.s32.totalorder %s45, %s46
      %p60 = scmp.eq.s32.totalorder %s26, 1
      %p61 = por %p59, %p60
      %p63 = scmp.ne.s32.totalorder %s46, %s62
      %p64 = scmp.eq.s32.totalorder %s26, 0
      %p65 = por %p63, %p64
      %s66 = ssub.s32 %s28, %s35
      %p67 = scmp.eq.s32.totalorder %s66, 0
      %s69 = sadd.s32 %s68, 1
      %s70 = scalar_select %p67, %s68, %s69
      %p73 = pneg %p67
      %p74 = scmp.eq.s32.totalorder %s20, 1
      %p75 = por %p73, %p74
      %p76 = scmp.ne.s32.totalorder %s68, %s71
      %p77 = scmp.eq.s32.totalorder %s20, 0
      %p78 = por %p76, %p77
      %p79 = scmp.ne.s32.totalorder %s68, %s71
      %p80 = scmp.eq.s32.totalorder %s25, 1
      %p81 = por %p79, %p80
      %p82 = scmp.ne.s32.totalorder %s71, %s72
      %p83 = scmp.eq.s32.totalorder %s25, 0
      %p84 = por %p82, %p83
      %p85 = scmp.ne.s32.totalorder %s71, %s72
      %p86 = scmp.eq.s32.totalorder %s26, 1
      %p87 = por %p85, %p86
      %p89 = scmp.ne.s32.totalorder %s72, %s88
      %p90 = scmp.eq.s32.totalorder %s26, 0
      %p91 = por %p89, %p90
      %s92 = ssub.s32 %s28, %s35
      %p93 = scmp.eq.s32.totalorder %s92, 0
      %s95 = sadd.s32 %s94, 1
      %s96 = scalar_select %p93, %s94, %s95
      %p99 = pneg %p93
      %p100 = scmp.eq.s32.totalorder %s20, 1
      %p101 = por %p99, %p100
      %p102 = scmp.ne.s32.totalorder %s94, %s97
      %p103 = scmp.eq.s32.totalorder %s20, 0
      %p104 = por %p102, %p103
      %p105 = scmp.ne.s32.totalorder %s94, %s97
      %p106 = scmp.eq.s32.totalorder %s25, 1
      %p107 = por %p105, %p106
      %p108 = scmp.ne.s32.totalorder %s97, %s98
      %p109 = scmp.eq.s32.totalorder %s25, 0
      %p110 = por %p108, %p109
      %p111 = scmp.ne.s32.totalorder %s97, %s98
      %p112 = scmp.eq.s32.totalorder %s26, 1
      %p113 = por %p111, %p112
      %p115 = scmp.ne.s32.totalorder %s98, %s114
      %p116 = scmp.eq.s32.totalorder %s26, 0
      %p117 = por %p115, %p116
      %s118 = ssub.s32 %s28, %s35
      %p119 = scmp.eq.s32.totalorder %s118, 0
      %s121 = sadd.s32 %s120, 1
      %s122 = scalar_select %p119, %s120, %s121
      %p125 = pneg %p119
      %p126 = scmp.eq.s32.totalorder %s20, 1
      %p127 = por %p125, %p126
      %p128 = scmp.ne.s32.totalorder %s120, %s123
      %p129 = scmp.eq.s32.totalorder %s20, 0
      %p130 = por %p128, %p129
      %p131 = scmp.ne.s32.totalorder %s120, %s123
      %p132 = scmp.eq.s32.totalorder %s25, 1
      %p133 = por %p131, %p132
      %p134 = scmp.ne.s32.totalorder %s123, %s124
      %p135 = scmp.eq.s32.totalorder %s25, 0
      %p136 = por %p134, %p135
      %p137 = scmp.ne.s32.totalorder %s123, %s124
      %p138 = scmp.eq.s32.totalorder %s26, 1
      %p139 = por %p137, %p138
      %p141 = scmp.ne.s32.totalorder %s124, %s140
      %p142 = scmp.eq.s32.totalorder %s26, 0
      %p143 = por %p141, %p142
      %s144 = ssub.s32 %s28, %s35
      %p145 = scmp.eq.s32.totalorder %s144, 0
      %s147 = sadd.s32 %s146, 1
      %s148 = scalar_select %p145, %s146, %s147
      %p151 = pneg %p145
      %p152 = scmp.eq.s32.totalorder %s20, 1
      %p153 = por %p151, %p152
      %p154 = scmp.ne.s32.totalorder %s146, %s149
      %p155 = scmp.eq.s32.totalorder %s20, 0
      %p156 = por %p154, %p155
      %p157 = scmp.ne.s32.totalorder %s146, %s149
      %p158 = scmp.eq.s32.totalorder %s25, 1
      %p159 = por %p157, %p158
      %p160 = scmp.ne.s32.totalorder %s149, %s150
      %p161 = scmp.eq.s32.totalorder %s25, 0
      %p162 = por %p160, %p161
      %p163 = scmp.ne.s32.totalorder %s149, %s150
      %p164 = scmp.eq.s32.totalorder %s26, 1
      %p165 = por %p163, %p164
      %p167 = scmp.ne.s32.totalorder %s150, %s166
      %p168 = scmp.eq.s32.totalorder %s26, 0
      %p169 = por %p167, %p168
      %s170 = ssub.s32 %s28, %s35
      %s171 = ssub.s32 %s27, %s39
      %s172 = sor.u32 %s170, %s171
      %p173 = scmp.eq.s32.totalorder %s172, 0
      %s175 = sadd.s32 %s174, 1
      %s176 = scalar_select %p173, %s174, %s175
      %p179 = pneg %p173
      %p180 = scmp.eq.s32.totalorder %s20, 1
      %p181 = por %p179, %p180
      %p182 = scmp.ne.s32.totalorder %s174, %s177
      %p183 = scmp.eq.s32.totalorder %s20, 0
      %p184 = por %p182, %p183
      %p185 = scmp.ne.s32.totalorder %s174, %s177
      %p186 = scmp.eq.s32.totalorder %s25, 1
      %p187 = por %p185, %p186
      %p188 = scmp.ne.s32.totalorder %s177, %s178
      %p189 = scmp.eq.s32.totalorder %s25, 0
      %p190 = por %p188, %p189
      %p191 = scmp.ne.s32.totalorder %s177, %s178
      %p192 = scmp.eq.s32.totalorder %s26, 1
      %p193 = por %p191, %p192
      %p195 = scmp.ne.s32.totalorder %s178, %s194
      %p196 = scmp.eq.s32.totalorder %s26, 0
      %p197 = por %p195, %p196
      %s198 = ssub.s32 %s27, %s39
      %p199 = scmp.eq.s32.totalorder %s198, 0
      %s201 = sadd.s32 %s200, 1
      %s202 = scalar_select %p199, %s200, %s201
      %p205 = pneg %p199
      %p206 = scmp.eq.s32.totalorder %s20, 1
      %p207 = por %p205, %p206
      %p208 = scmp.ne.s32.totalorder %s200, %s203
      %p209 = scmp.eq.s32.totalorder %s20, 0
      %p210 = por %p208, %p209
      %p211 = scmp.ne.s32.totalorder %s200, %s203
      %p212 = scmp.eq.s32.totalorder %s25, 1
      %p213 = por %p211, %p212
      %p214 = scmp.ne.s32.totalorder %s203, %s204
      %p215 = scmp.eq.s32.totalorder %s25, 0
      %p216 = por %p214, %p215
      %p217 = scmp.ne.s32.totalorder %s203, %s204
      %p218 = scmp.eq.s32.totalorder %s26, 1
      %p219 = por %p217, %p218
      %p221 = scmp.ne.s32.totalorder %s204, %s220
      %p222 = scmp.eq.s32.totalorder %s26, 0
      %p223 = por %p221, %p222
      %s224 = ssub.s32 %s28, %s35
      %s225 = ssub.s32 %s27, %s39
      %s226 = sor.u32 %s224, %s225
      %p227 = scmp.eq.s32.totalorder %s226, 0
      %s229 = sadd.s32 %s228, 1
      %s230 = scalar_select %p227, %s228, %s229
      %p233 = pneg %p227
      %p234 = scmp.eq.s32.totalorder %s20, 1
      %p235 = por %p233, %p234
      %p236 = scmp.ne.s32.totalorder %s228, %s231
      %p237 = scmp.eq.s32.totalorder %s20, 0
      %p238 = por %p236, %p237
      %p239 = scmp.ne.s32.totalorder %s228, %s231
      %p240 = scmp.eq.s32.totalorder %s25, 1
      %p241 = por %p239, %p240
      %p242 = scmp.ne.s32.totalorder %s231, %s232
      %p243 = scmp.eq.s32.totalorder %s25, 0
      %p244 = por %p242, %p243
      %p245 = scmp.ne.s32.totalorder %s231, %s232
      %p246 = scmp.eq.s32.totalorder %s26, 1
      %p247 = por %p245, %p246
      %p249 = scmp.ne.s32.totalorder %s232, %s248
      %p250 = scmp.eq.s32.totalorder %s26, 0
      %p251 = por %p249, %p250
      %p252 = scmp.le.s32.totalorder 1, %s20
      %p253 = scmp.lt.s32.totalorder %s20, 3
      %p254 = pnand %p252, %p253
      %p255 = pneg %p254
      // Predicated region
      $region9: #{gru_language_model.2} parent=5 // pred_check
        _
      $region10: #{gru_language_model.2} parent=5 // pred_check_branch
        %257 = sbr.rel (%p254) target = $region12
      $region11: #{gru_language_model.2} parent=5 // pred_region
        %s258 = ssub.s32 %s20, 1
        // Predicated region
        $region13: #{gru_language_model.2} parent=11 // pred_check
          %p259 = pneg %p58
        $region14: #{gru_language_model.2} parent=11 // pred_check_branch
          %261 = sbr.rel (%p259) target = $region16
        $region15: #{gru_language_model.2} parent=11 // pred_region
          %s262 = smul.u32 2, %s29
          %p263 = scmp.lt.s32.totalorder %s262, 1
          %s264 = scalar_select %p263, %s262, 1
          %s265 = smul.addr %s264, 8
          %s266 = scalar_lea.vmem %s0, %s265
          %s267 = smul.u32 2, %s29
        $region16: #{gru_language_model.2} parent=11 // pred_fallthru
          _
      $region12: #{gru_language_model.2} parent=5 // pred_fallthru
        _
      %p268 = scmp.lt.s32.totalorder %s20, 2
      // Predicated region
      $region17: #{gru_language_model.2} parent=5 // pred_check
        %p269 = pneg %p268
      $region18: #{gru_language_model.2} parent=5 // pred_check_branch
        %271 = sbr.rel (%p269) target = $region20
      $region19: #{gru_language_model.2} parent=5 // pred_region
        // Predicated region
        $region21: #{gru_language_model.2} parent=19 // pred_check
          %p272 = pneg %p78
        $region22: #{gru_language_model.2} parent=19 // pred_check_branch
          %274 = sbr.rel (%p272) target = $region24
        $region23: #{gru_language_model.2} parent=19 // pred_region
          %s275 = sand.u32 %s68, 1
          %s276 = scalar_lea.sflag [#allocation3], %s275
          %s277 = sand.u32 %s68, 1
          %s278 = smul.addr %s277, 128
          %s279 = scalar_lea.vmem [#allocation2], %s278
          %s281 = ssub.s32 2048, 2048
          %282 = vsyncadd %s276, %s281
          %s283 = smul.addr %s28, 32
          %s284 = smul.addr %s283, 64
          %s285 = scalar_lea.hbm %s1, %s284
          %s286 = sshll.u32 %s279, 4
          %s287 = int_to_ptr.vmem [resolvable:$true] %s286
          %292 = dma.hbm_to_vmem [thread:$0]  %s285, 2048, %s287, %s276, 128, 128, 8
        $region24: #{gru_language_model.2} parent=19 // pred_fallthru
          _
        // Predicated region
        $region25: #{gru_language_model.2} parent=19 // pred_check
          %p293 = pneg %p104
        $region26: #{gru_language_model.2} parent=19 // pred_check_branch
          %295 = sbr.rel (%p293) target = $region28
        $region27: #{gru_language_model.2} parent=19 // pred_region
          %p296 = scmp.lt.s32.totalorder %s28, 1
          %s297 = scalar_select %p296, %s28, 1
          %s298 = smul.addr %s297, 2
          %s299 = scalar_lea.vmem %s2, %s298
        $region28: #{gru_language_model.2} parent=19 // pred_fallthru
          _
        // Predicated region
        $region29: #{gru_language_model.2} parent=19 // pred_check
          %p300 = pneg %p130
        $region30: #{gru_language_model.2} parent=19 // pred_check_branch
          %302 = sbr.rel (%p300) target = $region32
        $region31: #{gru_language_model.2} parent=19 // pred_region
          %p303 = scmp.lt.s32.totalorder %s28, 1
          %s304 = scalar_select %p303, %s28, 1
          %s305 = scalar_lea.vmem %s3, %s304
        $region32: #{gru_language_model.2} parent=19 // pred_fallthru
          _
        // Predicated region
        $region33: #{gru_language_model.2} parent=19 // pred_check
          %p306 = pneg %p156
        $region34: #{gru_language_model.2} parent=19 // pred_check_branch
          %308 = sbr.rel (%p306) target = $region36
        $region35: #{gru_language_model.2} parent=19 // pred_region
          %p309 = scmp.lt.s32.totalorder %s28, 1
          %s310 = scalar_select %p309, %s28, 1
          %s311 = scalar_lea.vmem %s4, %s310
        $region36: #{gru_language_model.2} parent=19 // pred_fallthru
          _
        // Predicated region
        $region37: #{gru_language_model.2} parent=19 // pred_check
          %p312 = pneg %p184
        $region38: #{gru_language_model.2} parent=19 // pred_check_branch
          %314 = sbr.rel (%p312) target = $region40
        $region39: #{gru_language_model.2} parent=19 // pred_region
          %p315 = scmp.lt.s32.totalorder %s28, 1
          %s316 = scalar_select %p315, %s28, 1
          %p317 = scmp.lt.s32.totalorder %s27, 0
          %s318 = scalar_select %p317, %s27, 0
          %s319 = sadd.s32 %s318, %s316
          %s320 = smul.addr %s319, 2
          %s321 = scalar_lea.vmem %s5, %s320
        $region40: #{gru_language_model.2} parent=19 // pred_fallthru
          _
      $region20: #{gru_language_model.2} parent=5 // pred_fallthru
        _
      %p322 = scmp.le.s32.totalorder 1, %s20
      %p323 = scmp.lt.s32.totalorder %s20, 3
      %p324 = pnand %p322, %p323
      %p325 = pneg %p324
      // Predicated region
      $region41: #{gru_language_model.2} parent=5 // pred_check
        _
      $region42: #{gru_language_model.2} parent=5 // pred_check_branch
        %327 = sbr.rel (%p324) target = $region44
      $region43: #{gru_language_model.2} parent=5 // pred_region
        %s328 = ssub.s32 %s20, 1
        %s329 = sand.u32 %s71, 1
        %s330 = scalar_lea.sflag [#allocation3], %s329
        %s331 = sand.u32 %s71, 1
        %s332 = smul.addr %s331, 128
        %s333 = scalar_lea.vmem [#allocation2], %s332
        // Predicated region
        $region45: #{gru_language_model.2} parent=43 // pred_check
          %p334 = pneg %p84
        $region46: #{gru_language_model.2} parent=43 // pred_check_branch
          %336 = sbr.rel (%p334) target = $region48
        $region47: #{gru_language_model.2} parent=43 // pred_region
          %337 = dma.done %s330, 2048
        $region48: #{gru_language_model.2} parent=43 // pred_fallthru
          _
        %s338 = smul.u32 2, %s29
        %p339 = scmp.lt.s32.totalorder %s338, 1
        %s340 = scalar_select %p339, %s338, 1
        %s341 = smul.addr %s340, 8
        %s342 = scalar_lea.vmem %s0, %s341
        %p343 = pneg %p58
        %p344 = pneg %p55
        %s345 = sand.u32 %s71, 1
        %s346 = scalar_lea.sflag [#allocation3], %s345
        %s347 = sand.u32 %s71, 1
        %s348 = smul.addr %s347, 128
        %s349 = scalar_lea.vmem [#allocation2], %s348
        %p350 = pneg %p84
        %p351 = pneg %p81
        %p352 = scmp.lt.s32.totalorder %s30, 1
        %s353 = scalar_select %p352, %s30, 1
        %s354 = smul.addr %s353, 2
        %s355 = scalar_lea.vmem %s2, %s354
        %p356 = pneg %p110
        %p357 = pneg %p107
        %p358 = scmp.lt.s32.totalorder %s30, 1
        %s359 = scalar_select %p358, %s30, 1
        %s360 = scalar_lea.vmem %s3, %s359
        %p361 = pneg %p136
        %p362 = pneg %p133
        %p363 = scmp.lt.s32.totalorder %s30, 1
        %s364 = scalar_select %p363, %s30, 1
        %s365 = scalar_lea.vmem %s4, %s364
        %p366 = pneg %p162
        %p367 = pneg %p159
        %p368 = scmp.lt.s32.totalorder %s30, 1
        %s369 = scalar_select %p368, %s30, 1
        %p370 = scmp.lt.s32.totalorder %s29, 0
        %s371 = scalar_select %p370, %s29, 0
        %s372 = sadd.s32 %s371, %s369
        %s373 = smul.addr %s372, 2
        %s374 = scalar_lea.vmem %s5, %s373
        %p375 = pneg %p190
        %p376 = pneg %p187
        %p377 = pneg %p216
        %p378 = pneg %p213
        %s379 = smul.u32 2, %s29
        %p380 = scmp.lt.s32.totalorder %s379, 1
        %s381 = scalar_select %p380, %s379, 1
        %s382 = smul.addr %s381, 8
        %s383 = scalar_lea.vmem %s6, %s382
        %p384 = pneg %p244
        %p385 = pneg %p241
        %s386 = sand.u32 %s231, 1
        %s387 = scalar_lea.sflag [#allocation4], %s386
        %s388 = sand.u32 %s231, 1
        %s389 = smul.addr %s388, 2
        %s390 = scalar_lea.vmem [#allocation5], %s389
        %s391 = smul.u32 2, %s29
        %p392 = scmp.lt.s32.totalorder %s391, 1
        %s393 = scalar_select %p392, %s391, 1
        %s394 = smul.addr %s393, 8
        %s395 = scalar_lea.vmem %s0, %s394
        %s396 = smul.u32 2, %s29
        %p397 = scmp.lt.s32.totalorder %s30, 1
        %s398 = scalar_select %p397, %s30, 1
        %s399 = smul.addr %s398, 2
        %s400 = scalar_lea.vmem %s2, %s399
        %p401 = scmp.lt.s32.totalorder %s30, 1
        %s402 = scalar_select %p401, %s30, 1
        %s403 = scalar_lea.vmem %s3, %s402
        %p404 = scmp.lt.s32.totalorder %s30, 1
        %s405 = scalar_select %p404, %s30, 1
        %s406 = scalar_lea.vmem %s4, %s405
        %p407 = scmp.lt.s32.totalorder %s30, 1
        %s408 = scalar_select %p407, %s30, 1
        %p409 = scmp.lt.s32.totalorder %s29, 0
        %s410 = scalar_select %p409, %s29, 0
        %s411 = sadd.s32 %s410, %s408
        %s412 = smul.addr %s411, 2
        %s413 = scalar_lea.vmem %s5, %s412
        %s414 = smul.u32 2, %s29
        %p415 = scmp.lt.s32.totalorder %s414, 1
        %s416 = scalar_select %p415, %s414, 1
        %s417 = smul.addr %s416, 8
        %s418 = scalar_lea.vmem %s6, %s417
        %s419 = smul.u32 2, %s29
        %p421 = scmp.eq.s32.totalorder %s30, 0
        // Predicated region
        $region49: #{gru_language_model.2} parent=43 // pred_check
          %p422 = pneg %p421
        $region50: #{gru_language_model.2} parent=43 // pred_check_branch
          %424 = sbr.rel (%p422) target = $region52
        $region51: #{gru_language_model.2} parent=43 // pred_region
          %v425 = vld [vmem:[%s395] sm:$0xff]
          %v426 = vld [vmem:[%s395 + $0x8] sm:$0xff]
          %427 = vst [vmem:[%s418] sm:$0xff] %v425
          %428 = vst [vmem:[%s418 + $0x8] sm:$0xff] %v426
        $region52: #{gru_language_model.2} parent=43 // pred_fallthru
          _
        %v429 = vld [vmem:[%s418] sm:$0xff]
        %v430 = vld [vmem:[%s418 + $0x8] sm:$0xff]
        %v431 = vpack.c.bf16 %v430, %v429
        %v432 = vld [vmem:[%s333] sm:$0xff]
        %v433 = vld [vmem:[%s333 + $0x8] sm:$0xff]
        %v434 = vld [vmem:[%s333 + $0x10] sm:$0xff]
        %v435 = vld [vmem:[%s333 + $0x18] sm:$0xff]
        %v436 = vld [vmem:[%s333 + $0x20] sm:$0xff]
        %v437 = vld [vmem:[%s333 + $0x28] sm:$0xff]
        %v438 = vld [vmem:[%s333 + $0x30] sm:$0xff]
        %v439 = vld [vmem:[%s333 + $0x38] sm:$0xff]
        %v440 = vld [vmem:[%s333 + $0x40] sm:$0xff]
        %v441 = vld [vmem:[%s333 + $0x48] sm:$0xff]
        %v442 = vld [vmem:[%s333 + $0x50] sm:$0xff]
        %v443 = vld [vmem:[%s333 + $0x58] sm:$0xff]
        %v444 = vld [vmem:[%s333 + $0x60] sm:$0xff]
        %v445 = vld [vmem:[%s333 + $0x68] sm:$0xff]
        %v446 = vld [vmem:[%s333 + $0x70] sm:$0xff]
        %v447 = vld [vmem:[%s333 + $0x78] sm:$0xff]
        %v448 = vld [vmem:[%s400] sm:$0x3]
        %v450 = vlaneseq
        %v451 = vshrl.u32 %v450, 7
        %v452 = vsub.s32 0, %v451
        %v453 = vrot.slane %v448, %v452
        %v454 = vlaneseq
        %v455 = vshrl.u32 %v454, 7
        %v456 = vsub.s32 1, %v455
        %v457 = vrot.slane %v448, %v456
        %v476 = vunpack.c.l.b16 %v432
        %v477 = vunpack.c.h.b16 %v432
        %v478 = vunpack.c.l.b16 %v433
        %v479 = vunpack.c.h.b16 %v433
        %v480 = vunpack.c.l.b16 %v434
        %v481 = vunpack.c.h.b16 %v434
        %v482 = vunpack.c.l.b16 %v435
        %v483 = vunpack.c.h.b16 %v435
        %v484 = vunpack.c.l.b16 %v436
        %v485 = vunpack.c.h.b16 %v436
        %v486 = vunpack.c.l.b16 %v437
        %v487 = vunpack.c.h.b16 %v437
        %v488 = vunpack.c.l.b16 %v438
        %v489 = vunpack.c.h.b16 %v438
        %v490 = vunpack.c.l.b16 %v439
        %v491 = vunpack.c.h.b16 %v439
        %v492 = vunpack.c.l.b16 %v440
        %v493 = vunpack.c.h.b16 %v440
        %v494 = vunpack.c.l.b16 %v441
        %v495 = vunpack.c.h.b16 %v441
        %v496 = vunpack.c.l.b16 %v442
        %v497 = vunpack.c.h.b16 %v442
        %v498 = vunpack.c.l.b16 %v443
        %v499 = vunpack.c.h.b16 %v443
        %v500 = vunpack.c.l.b16 %v444
        %v501 = vunpack.c.h.b16 %v444
        %v502 = vunpack.c.l.b16 %v445
        %v503 = vunpack.c.h.b16 %v445
        %v504 = vunpack.c.l.b16 %v446
        %v505 = vunpack.c.h.b16 %v446
        %v506 = vunpack.c.l.b16 %v447
        %v507 = vunpack.c.h.b16 %v447
        %v508 = vpack.c.b16 %v478, %v476
        %v509 = vpack.c.b16 %v479, %v477
        %v510 = vpack.c.b16 %v482, %v480
        %v511 = vpack.c.b16 %v483, %v481
        %v512 = vpack.c.b16 %v486, %v484
        %v513 = vpack.c.b16 %v487, %v485
        %v514 = vpack.c.b16 %v490, %v488
        %v515 = vpack.c.b16 %v491, %v489
        %v516 = vpack.c.b16 %v494, %v492
        %v517 = vpack.c.b16 %v495, %v493
        %v518 = vpack.c.b16 %v498, %v496
        %v519 = vpack.c.b16 %v499, %v497
        %v520 = vpack.c.b16 %v502, %v500
        %v521 = vpack.c.b16 %v503, %v501
        %v522 = vpack.c.b16 %v506, %v504
        %v523 = vpack.c.b16 %v507, %v505
        %540 = vmatprep.subr.bf16.mxu0 %v509
        %541 = vmatpush1.bf16.msra.mxu0 %v508
        %542 = vmatprep.subr.bf16.mxu0 %v511
        %543 = vmatpush1.bf16.msra.mxu0 %v510
        %544 = vmatprep.subr.bf16.mxu0 %v513
        %545 = vmatpush1.bf16.msra.mxu0 %v512
        %546 = vmatprep.subr.bf16.mxu0 %v515
        %547 = vmatpush1.bf16.msra.mxu0 %v514
        %548 = vmatprep.subr.bf16.mxu0 %v517
        %549 = vmatpush1.bf16.msra.mxu0 %v516
        %550 = vmatprep.subr.bf16.mxu0 %v519
        %551 = vmatpush1.bf16.msra.mxu0 %v518
        %552 = vmatprep.subr.bf16.mxu0 %v521
        %553 = vmatpush1.bf16.msra.mxu0 %v520
        %554 = vmatprep.subr.bf16.mxu0 %v523
        %555 = vmatpush1.bf16.msra.mxu0 %v522
        %556 = vmatprep.subr.bf16.mxu0 0
        %557 = vmatpush1.bf16.msra.mxu0 0
        %558 = vmatprep.subr.bf16.mxu0 0
        %559 = vmatpush1.bf16.msra.mxu0 0
        %560 = vmatprep.subr.bf16.mxu0 0
        %561 = vmatpush1.bf16.msra.mxu0 0
        %562 = vmatprep.subr.bf16.mxu0 0
        %563 = vmatpush1.bf16.msra.mxu0 0
        %564 = vmatprep.subr.bf16.mxu0 0
        %565 = vmatpush1.bf16.msra.mxu0 0
        %566 = vmatprep.subr.bf16.mxu0 0
        %567 = vmatpush1.bf16.msra.mxu0 0
        %568 = vmatprep.subr.bf16.mxu0 0
        %569 = vmatpush1.bf16.msra.mxu0 0
        %570 = vmatprep.subr.bf16.mxu0 0
        %571 = vmatpush1.bf16.msra.mxu0 0
        %572 = vmatprep.mubr.bf16.mxu0 0
        %573 = vmatmul.mubr.bf16.gmra.mrb[0].mxu0 %v431
        %v574 = vpop.f32.mrb[0].mxu0
        %v575 = vadd.f32 %v453, %v574
        %v576 = vpop.f32.mrb[0].mxu0
        %v577 = vadd.f32 %v457, %v576
        %v578 = vpop.f32.mrb[0].mxu0
        %v579 = vadd.f32 %v453, %v578
        %v580 = vpop.f32.mrb[0].mxu0
        %v581 = vadd.f32 %v457, %v580
        %582 = vdwg.mxu0
        %v583 = vxor.u32 %v575, 2147483648
        %v584 = vxor.u32 %v579, 2147483648
        %v585 = vmul.f32 %v583, 1.442695
        %v586 = vpow.pop %v585
        %v587 = vmul.f32 %v584, 1.442695
        %v588 = vpow.pop %v587
        %v589 = vadd.f32 %v586, 1.0
        %v590 = vadd.f32 %v588, 1.0
        %v591 = vrcp.pop %v589
        %v592 = vmul.f32 1.0, %v591
        %v593 = vrcp.pop %v590
        %v594 = vmul.f32 1.0, %v593
        %v595 = vsub.f32 1.0, %v592
        %v596 = vsub.f32 1.0, %v594
        %v597 = vmul.f32 %v592, %v577
        %v598 = vmul.f32 %v594, %v581
        %v599 = vlaneseq
        %v600 = vshrl.u32 %v599, 7
        %v601 = vld [vmem:[%s403] sm:$0x1]
        %v602 = vld [vmem:[%s406] sm:$0x1]
        %v603 = vld [vmem:[%s413] sm:$0x3]
        %vm604 = vcmp.ge.s32.totalorder %v600, 1
        %v605 = vrot.slane %v595, 7
        %v606 = vrot.slane %v596, 7
        %vm607 = vcmp.lt.s32.totalorder %v600, 1
        %v608 = vsel %vm607, %v605, %v606
        %v609 = vsel %vm607, %v606, %v605
        %v610 = vsel %vm604, %v609, 1.0
        %v611 = vsel %vm604, %v608, 1.0
        %v612 = vrot.slane %v597, 7
        %v613 = vrot.slane %v598, 7
        %v614 = vsel %vm607, %v612, %v613
        %v615 = vsel %vm607, %v613, %v612
        %v616 = vsel %vm604, %v615, 0.0
        %v617 = vsel %vm604, %v614, 0.0
        %v618 = vmul.f32 %v595, %v616
        %v619 = vmul.f32 %v596, %v617
        %v620 = vadd.f32 %v618, %v597
        %v621 = vadd.f32 %v619, %v598
        %v622 = vmul.f32 %v595, %v610
        %v623 = vmul.f32 %v596, %v611
        %vm624 = vcmp.ge.s32.totalorder %v600, 2
        %v625 = vrot.slane %v622, 6
        %v626 = vrot.slane %v623, 6
        %vm627 = vcmp.lt.s32.totalorder %v600, 2
        %v628 = vsel %vm627, %v625, %v626
        %v629 = vsel %vm627, %v626, %v625
        %v630 = vsel %vm624, %v629, 1.0
        %v631 = vsel %vm624, %v628, 1.0
        %v632 = vrot.slane %v620, 6
        %v633 = vrot.slane %v621, 6
        %v634 = vsel %vm627, %v632, %v633
        %v635 = vsel %vm627, %v633, %v632
        %v636 = vsel %vm624, %v635, 0.0
        %v637 = vsel %vm624, %v634, 0.0
        %v638 = vmul.f32 %v622, %v636
        %v639 = vmul.f32 %v623, %v637
        %v640 = vadd.f32 %v638, %v620
        %v641 = vadd.f32 %v639, %v621
        %v642 = vmul.f32 %v622, %v630
        %v643 = vmul.f32 %v623, %v631
        %vm644 = vcmp.ge.s32.totalorder %v600, 4
        %v645 = vrot.slane %v642, 4
        %v646 = vrot.slane %v643, 4
        %vm647 = vcmp.lt.s32.totalorder %v600, 4
        %v648 = vsel %vm647, %v645, %v646
        %v649 = vsel %vm647, %v646, %v645
        %v650 = vsel %vm644, %v649, 1.0
        %v651 = vsel %vm644, %v648, 1.0
        %v652 = vrot.slane %v640, 4
        %v653 = vrot.slane %v641, 4
        %v654 = vsel %vm647, %v652, %v653
        %v655 = vsel %vm647, %v653, %v652
        %v656 = vsel %vm644, %v655, 0.0
        %v657 = vsel %vm644, %v654, 0.0
        %v658 = vmul.f32 %v642, %v656
        %v659 = vmul.f32 %v643, %v657
        %v660 = vadd.f32 %v658, %v640
        %v661 = vadd.f32 %v659, %v641
        %v662 = vmul.f32 %v642, %v650
        %v663 = vmul.f32 %v643, %v651
        %v666 = vunpack.c.l.s4 1966171168
        %v667 = vunpack.c.0.s8 %v666
        %v668 = vlaneseq
        %v669 = vshrl.u32 %v668, 7
        %v670 = vsub.s32 %v667, %v669
        %v671 = vrot.slane %v603, %v670
        %v672 = vcombine.high %v671, %v671
        %v674 = vunpack.c.l.s4 1966171168
        %v675 = vunpack.c.0.s8 %v674
        %v676 = vlaneseq
        %v677 = vshrl.u32 %v676, 7
        %v678 = vsub.s32 %v675, %v677
        %v679 = vrot.slane %v671, %v678
        %v681 = vunpack.c.l.s4 1966171168
        %v682 = vunpack.c.0.s8 %v681
        %v683 = vlaneseq
        %v684 = vshrl.u32 %v683, 7
        %v685 = vsub.s32 %v682, %v684
        %v686 = vrot.slane %v672, %v685
        %v687 = vlaneseq
        %v688 = vshrl.u32 %v687, 7
        %v689 = vsub.s32 0, %v688
        %v690 = vrot.slane %v679, %v689
        %v691 = vlaneseq
        %v692 = vshrl.u32 %v691, 7
        %v693 = vsub.s32 0, %v692
        %v694 = vrot.slane %v686, %v693
        %v697 = vmul.f32 %v662, %v690
        %v698 = vmul.f32 %v663, %v694
        %v699 = vadd.f32 %v697, %v660
        %v700 = vadd.f32 %v698, %v661
        %701 = vadd.xlane.f32.xlu0 %v699
        %v702 = vpop.xlane.xlu0 %701
        %703 = vadd.xlane.f32.xlu0 %v700
        %v704 = vpop.xlane.xlu0 %703
        %v705 = vrcp.pop 128.0
        %v706 = vmul.f32 %v702, %v705
        %v707 = vmul.f32 %v704, %v705
        %v708 = vsub.f32 %v699, %v706
        %v709 = vsub.f32 %v700, %v707
        %v710 = vmul.f32 %v708, %v708
        %v711 = vmul.f32 %v709, %v709
        %712 = vadd.xlane.f32.xlu0 %v710
        %v713 = vpop.xlane.xlu0 %712
        %714 = vadd.xlane.f32.xlu0 %v711
        %v715 = vpop.xlane.xlu0 %714
        %v716 = vmul.f32 %v713, %v705
        %v717 = vmul.f32 %v715, %v705
        %v718 = vadd.f32 %v716, 1e-05
        %v719 = vadd.f32 %v717, 1e-05
        %v720 = vrsqrt.pop %v718
        %v721 = vrsqrt.pop %v719
        %v722 = vmul.f32 %v708, %v720
        %v723 = vmul.f32 %v709, %v721
        %v725 = vlaneseq
        %v726 = vshrl.u32 %v725, 7
        %v727 = vsub.s32 0, %v726
        %v728 = vrot.slane %v601, %v727
        %v730 = vmul.f32 %v722, %v728
        %v731 = vmul.f32 %v723, %v728
        %v733 = vlaneseq
        %v734 = vshrl.u32 %v733, 7
        %v735 = vsub.s32 0, %v734
        %v736 = vrot.slane %v602, %v735
        %v738 = vadd.f32 %v730, %v736
        %v739 = vadd.f32 %v731, %v736
        %v740 = vadd.f32 %v738, %v429
        %v741 = vadd.f32 %v739, %v430
        %742 = vst [vmem:[%s418] sm:$0xff] %v740
        %743 = vst [vmem:[%s418 + $0x8] sm:$0xff] %v741
        %v746 = vrot.slane %v700, 7
        %749 = vst [vmem:[%s390 - $0x7] sm:$0x80] %v699
        %750 = vst [vmem:[%s390 + $0x1] sm:$0x1] %v746
        %s751 = smul.u32 2, %s29
        %p752 = scmp.lt.s32.totalorder %s751, 1
        %s753 = scalar_select %p752, %s751, 1
        %s754 = smul.addr %s753, 8
        %s755 = scalar_lea.vmem %s6, %s754
        %s756 = sand.u32 %s231, 1
        %s757 = scalar_lea.sflag [#allocation4], %s756
        %s758 = sand.u32 %s231, 1
        %s759 = smul.addr %s758, 2
        %s760 = scalar_lea.vmem [#allocation5], %s759
        // Predicated region
        $region53: #{gru_language_model.2} parent=43 // pred_check
          %p761 = pneg %p213
        $region54: #{gru_language_model.2} parent=43 // pred_check_branch
          %763 = sbr.rel (%p761) target = $region56
        $region55: #{gru_language_model.2} parent=43 // pred_region
          %s764 = smul.u32 2, %s29
        $region56: #{gru_language_model.2} parent=43 // pred_fallthru
          _
        // Predicated region
        $region57: #{gru_language_model.2} parent=43 // pred_check
          %p765 = pneg %p241
        $region58: #{gru_language_model.2} parent=43 // pred_check_branch
          %767 = sbr.rel (%p765) target = $region60
        $region59: #{gru_language_model.2} parent=43 // pred_region
          %s769 = ssub.s32 32, 32
          %770 = vsyncadd %s757, %s769
          %s771 = sadd.s32 %s29, %s30
          %s772 = smul.addr %s771, 32
          %s773 = scalar_lea.hbm %s7, %s772
          %s775 = sshll.u32 %s760, 4
          %s776 = int_to_ptr.vmem [resolvable:$true] %s775
          %778 = dma.vmem_to_hbm [thread:$0]  %s776, 32, %s773, %s757
        $region60: #{gru_language_model.2} parent=43 // pred_fallthru
          _
        // Predicated region
        $region61: #{gru_language_model.2} parent=43 // pred_check
          %p779 = pneg %p213
        $region62: #{gru_language_model.2} parent=43 // pred_check_branch
          %781 = sbr.rel (%p779) target = $region64
        $region63: #{gru_language_model.2} parent=43 // pred_region
          %s782 = smul.u32 2, %s29
          %p783 = scmp.lt.s32.totalorder %s782, 1
          %s784 = scalar_select %p783, %s782, 1
          %s785 = smul.addr %s784, 8
          %s786 = scalar_lea.vmem %s6, %s785
        $region64: #{gru_language_model.2} parent=43 // pred_fallthru
          _
      $region44: #{gru_language_model.2} parent=5 // pred_fallthru
        _
      %p787 = scmp.le.s32.totalorder 2, %s20
      // Predicated region
      $region65: #{gru_language_model.2} parent=5 // pred_check
        %p788 = pneg %p787
      $region66: #{gru_language_model.2} parent=5 // pred_check_branch
        %790 = sbr.rel (%p788) target = $region68
      $region67: #{gru_language_model.2} parent=5 // pred_region
        %s791 = ssub.s32 %s20, 2
        // Predicated region
        $region69: #{gru_language_model.2} parent=67 // pred_check
          %p792 = pneg %p247
        $region70: #{gru_language_model.2} parent=67 // pred_check_branch
          %794 = sbr.rel (%p792) target = $region72
        $region71: #{gru_language_model.2} parent=67 // pred_region
          %s795 = sand.u32 %s232, 1
          %s796 = scalar_lea.sflag [#allocation4], %s795
          %s797 = sand.u32 %s232, 1
          %s798 = smul.addr %s797, 2
          %s799 = scalar_lea.vmem [#allocation5], %s798
          %800 = dma.done %s796, 32
        $region72: #{gru_language_model.2} parent=67 // pred_fallthru
          _
      $region68: #{gru_language_model.2} parent=5 // pred_fallthru
        _
    $region6: #{gru_language_model.2} parent=1 // loop_footer
      %s24 = sadd.s32 1, %s20
    $region7: #{gru_language_model.2} parent=1 // loop_footer_branch
      %19 = sbr.rel target = $region3
    $region8: #{gru_language_model.2} parent=1 // loop_exit
      _
    %801 = vsyncpa [#allocation3], 1
    %s802 = scalar_lea.sflag [#allocation3], 1
    %803 = vsyncpa %s802, 1
    %804 = vsyncpa [#allocation4], 1
    %s805 = scalar_lea.sflag [#allocation4], 1
    %806 = vsyncpa %s805, 1

</llo_original>
